<compile_context>
chip_gen: v7x
topology: tpu7x:2x2x1
jax: 0.10.0
libtpu: 0.0.40
codegen_flags: <defaults>
</compile_context>

<pallas_src>
import jax
import jax.numpy as jnp
from jax.experimental import pallas as pl
from jax.experimental.pallas import tpu as pltpu


def _mlp_kernel(x_ref, r_ref,
                w1x_ref, w1r_ref, b1_ref,
                w2_ref, b2_ref,
                w3_ref, b3_ref,
                w4_ref, b4_ref,
                out_ref):
    bf16 = jnp.bfloat16
    # Layer 1: [TB, CTX]@[CTX, H] + [TB, NOBJ]@[NOBJ, H]  (== concat([x, r]) @ W1)
    h = jnp.dot(x_ref[...].astype(bf16), w1x_ref[...],
                preferred_element_type=jnp.float32)
    h = h + jnp.dot(r_ref[...].astype(bf16), w1r_ref[...],
                    preferred_element_type=jnp.float32)
    h = jnp.maximum(h + b1_ref[...], 0.0)
    # Layer 2: [TB, H] @ [H, H] (bf16 in, f32 accumulate)
    h = jnp.dot(h.astype(bf16), w2_ref[...], preferred_element_type=jnp.float32)
    h = jnp.maximum(h + b2_ref[...], 0.0)
    # Layer 3: [TB, H] @ [H, H]
    h = jnp.dot(h.astype(bf16), w3_ref[...], preferred_element_type=jnp.float32)
    h = jnp.maximum(h + b3_ref[...], 0.0)
    # Output head (out_features == 1): VPU multiply + lane reduction instead of
    # an N=1 MXU matmul (which would waste >99% of the MXU columns).
    logits = jnp.sum(h * w4_ref[...], axis=-1, keepdims=True) + b4_ref[...]
    out_ref[...] = jax.nn.sigmoid(logits)


def _round_up(n, m):
    return (n + m - 1) // m * m


def prepare_params(params, context_size):
    """One-time weight preprocessing (do NOT call per forward).

    Splits W1 (removes the wrapper-side concat), casts the matmul weights to
    bf16 (halves the dominant weight HBM stream, doubles MXU rate), reshapes
    biases / head weight into (1, H) rows. Reuse the returned dict across calls.
    """
    w1, b1, w2, b2, w3, b3, w4, b4 = params
    bf16, f32 = jnp.bfloat16, jnp.float32
    H = w2.shape[0]
    return dict(
        w1x=w1[:context_size].astype(bf16),
        w1r=w1[context_size:].astype(bf16),
        b1=b1.reshape(1, H).astype(f32),
        w2=w2.astype(bf16),
        b2=b2.reshape(1, H).astype(f32),
        w3=w3.astype(bf16),
        b3=b3.reshape(1, H).astype(f32),
        w4=w4.reshape(1, H).astype(f32),
        b4=b4.reshape(1, 1).astype(f32),
    )


# Feature-detect pipeline_mode=pl.Buffered(1) (single-buffer resident weights);
# fall back silently to default double buffering on older jax.
_RESIDENT_KW = {}
if hasattr(pl, "Buffered"):
    try:
        pl.BlockSpec((8, 128), lambda i: (0, 0), pipeline_mode=pl.Buffered(1))
        _RESIDENT_KW = {"pipeline_mode": pl.Buffered(1)}
    except TypeError:
        _RESIDENT_KW = {}


def general_network_forward(x, r, prepared, *, tile_b=512):
    """sigmoid(MLP(concat([x, r], -1))).squeeze(-1), eval mode, one fused kernel.

    `prepared` is the dict from prepare_params(). x/r may be f32 or bf16.
    """
    B, ctx = x.shape
    nobj = r.shape[1]
    H = prepared["w2"].shape[0]
    assert prepared["w1x"].shape[0] == ctx and prepared["w1r"].shape[0] == nobj

    # Batch tile: aim for >= 2 grid steps (megacore on v7x) when B is small,
    # large 256-multiple tiles for big B (amortize pushing W2/W3 through the
    # MXU and the ~0.35us per-step overhead). No jnp.pad: Pallas boundary
    # blocks handle the ragged tail (rows independent, OOB outputs discarded).
    if B <= 2 * tile_b:
        tile_b = max(8, _round_up(pl.cdiv(B, 2), 8))
    else:
        tile_b = _round_up(tile_b, 256)
    grid = (pl.cdiv(B, tile_b),)

    def batch_spec(feat):
        return pl.BlockSpec((tile_b, feat), lambda i: (i, 0))

    def resident_spec(shape):
        # Constant index_map -> block is DMA'd once and stays VMEM-resident;
        # single-buffered since it is never re-fetched.
        return pl.BlockSpec(shape, lambda i: (0, 0), **_RESIDENT_KW)

    # VMEM budget: resident weights (single copy) + double-buffered activation
    # tiles + generous allowance for the (tile_b, H) f32 intermediates.
    bytes_weights = sum(int(v.size) * v.dtype.itemsize for v in prepared.values())
    bytes_io = 2 * tile_b * (ctx * x.dtype.itemsize + nobj * r.dtype.itemsize + 4)
    bytes_tmp = 6 * tile_b * H * 4
    vmem_limit = bytes_weights + bytes_io + bytes_tmp + (4 << 20)
    vmem_limit = int(min(max(vmem_limit, 32 << 20), 100 << 20))

    din = ctx + nobj
    flops = 2 * B * (din * H + 2 * H * H + H)
    bytes_accessed = (bytes_weights
                      + B * (ctx * x.dtype.itemsize + nobj * r.dtype.itemsize)
                      + B * 4)
    cost = pl.CostEstimate(flops=flops, transcendentals=B,
                           bytes_accessed=bytes_accessed)

    out = pl.pallas_call(
        _mlp_kernel,
        out_shape=jax.ShapeDtypeStruct((B, 1), jnp.float32),
        grid=grid,
        in_specs=[
            batch_spec(ctx),                 # x tile
            batch_spec(nobj),                # r tile
            resident_spec((ctx, H)),         # W1[:ctx]   (bf16)
            resident_spec((nobj, H)),        # W1[ctx:]   (bf16)
            resident_spec((1, H)),           # b1
            resident_spec((H, H)),           # W2         (bf16)
            resident_spec((1, H)),           # b2
            resident_spec((H, H)),           # W3         (bf16)
            resident_spec((1, H)),           # b3
            resident_spec((1, H)),           # W4 row     (f32, VPU head)
            resident_spec((1, 1)),           # b4
        ],
        out_specs=pl.BlockSpec((tile_b, 1), lambda i: (i, 0)),
        compiler_params=pltpu.CompilerParams(
            dimension_semantics=("parallel",),
            vmem_limit_bytes=vmem_limit),
        cost_estimate=cost,
    )(x, r,
      prepared["w1x"], prepared["w1r"], prepared["b1"],
      prepared["w2"], prepared["b2"],
      prepared["w3"], prepared["b3"],
      prepared["w4"], prepared["b4"])
    return out[:, 0]  # squeeze(-1)


def init_params(key, context_size, n_objectives, hidden_dim):
    """Deterministic init mimicking torch.nn.Linear (uniform +/- 1/sqrt(fan_in)).

    Weights stored as [in_features, out_features]; biases as [out_features].
    """
    in_features = context_size + n_objectives
    dims = [(in_features, hidden_dim),
            (hidden_dim, hidden_dim),
            (hidden_dim, hidden_dim),
            (hidden_dim, 1)]
    params = []
    for fan_in, fan_out in dims:
        key, kw, kb = jax.random.split(key, 3)
        bound = 1.0 / jnp.sqrt(fan_in)
        w = jax.random.uniform(kw, (fan_in, fan_out), jnp.float32, -bound, bound)
        b = jax.random.uniform(kb, (fan_out,), jnp.float32, -bound, bound)
        params += [w, b]
    return tuple(params)


def _reference_forward_mixed(x, r, params):
    """Pure-JAX reference with the same bf16-in / f32-accumulate mixed precision."""
    w1, b1, w2, b2, w3, b3, w4, b4 = params
    bf16, f32 = jnp.bfloat16, jnp.float32
    h = jnp.concatenate([x, r], axis=-1)
    h = jax.nn.relu(jnp.dot(h.astype(bf16), w1.astype(bf16),
                            preferred_element_type=f32) + b1)
    h = jax.nn.relu(jnp.dot(h.astype(bf16), w2.astype(bf16),
                            preferred_element_type=f32) + b2)
    h = jax.nn.relu(jnp.dot(h.astype(bf16), w3.astype(bf16),
                            preferred_element_type=f32) + b3)
    logits = jnp.dot(h, w4, preferred_element_type=f32,
                     precision=jax.lax.Precision.HIGHEST) + b4
    return jax.nn.sigmoid(logits)[:, 0]


def _reference_forward_f32(x, r, params):
    """Full-f32 reference matching the eval-mode PyTorch module exactly."""
    w1, b1, w2, b2, w3, b3, w4, b4 = params
    hp = jax.lax.Precision.HIGHEST
    h = jnp.concatenate([x.astype(jnp.float32), r.astype(jnp.float32)], axis=-1)
    h = jax.nn.relu(jnp.dot(h, w1, precision=hp) + b1)
    h = jax.nn.relu(jnp.dot(h, w2, precision=hp) + b2)
    h = jax.nn.relu(jnp.dot(h, w3, precision=hp) + b3)
    return jax.nn.sigmoid(jnp.dot(h, w4, precision=hp) + b4)[:, 0]


if __name__ == "__main__":
    # Small shapes consistent with the module: batch=8, context_size=16,
    # n_objectives=4, hidden_dim=128 (lane-aligned stand-in for 1024).
    B, CTX, NOBJ, HID = 8, 16, 4, 128

    key = jax.random.PRNGKey(0)
    kx, kr, kp = jax.random.split(key, 3)
    x = jax.random.normal(kx, (B, CTX), jnp.float32)
    r = jax.random.normal(kr, (B, NOBJ), jnp.float32)
    params = init_params(kp, CTX, NOBJ, HID)
    prepared = prepare_params(params, CTX)  # one-time weight preprocessing

    out = jax.block_until_ready(general_network_forward(x, r, prepared))
    assert out.shape == (B,), out.shape
    ref = _reference_forward_mixed(x, r, params)
    assert jnp.allclose(out, ref, atol=1e-3, rtol=1e-3), (out, ref)
    # Loose check against the true f32 module semantics (bf16 matmul rounding).
    ref_f32 = _reference_forward_f32(x, r, params)
    assert jnp.allclose(out, ref_f32, atol=5e-2), (out, ref_f32)

    # Multi-step grid + ragged boundary block (B not a multiple of tile_b).
    B2 = 300
    kx2, kr2 = jax.random.split(kx)
    x2 = jax.random.normal(kx2, (B2, CTX), jnp.float32)
    r2 = jax.random.normal(kr2, (B2, NOBJ), jnp.float32)
    out2 = jax.block_until_ready(general_network_forward(x2, r2, prepared))
    assert out2.shape == (B2,), out2.shape
    ref2 = _reference_forward_mixed(x2, r2, params)
    assert jnp.allclose(out2, ref2, atol=1e-3, rtol=1e-3)

    # bf16 activation inputs (no wrapper-side promotion to f32).
    out2b = jax.block_until_ready(
        general_network_forward(x2.astype(jnp.bfloat16),
                                r2.astype(jnp.bfloat16), prepared))
    ref2b = _reference_forward_mixed(x2.astype(jnp.bfloat16),
                                     r2.astype(jnp.bfloat16), params)
    assert jnp.allclose(out2b, ref2b, atol=2e-3, rtol=2e-3)

    # Large-batch branch (B > 2*tile_b) with a ragged tail.
    B3 = 1300
    kx3, kr3 = jax.random.split(kr)
    x3 = jax.random.normal(kx3, (B3, CTX), jnp.float32)
    r3 = jax.random.normal(kr3, (B3, NOBJ), jnp.float32)
    out3 = jax.block_until_ready(
        general_network_forward(x3, r3, prepared, tile_b=512))
    assert out3.shape == (B3,), out3.shape
    ref3 = _reference_forward_mixed(x3, r3, params)
    assert jnp.allclose(out3, ref3, atol=1e-3, rtol=1e-3)

    print("KERNEL_OK")
</pallas_src>

<mosaic_0001>
module attributes {stable_mosaic.version = 11 : i64} {
  func.func @_mlp_kernel(%arg0: i32, %arg1: memref<8x16xf32, #tpu.memory_space<vmem>>, %arg2: memref<8x4xf32, #tpu.memory_space<vmem>>, %arg3: memref<16x128xbf16, #tpu.memory_space<vmem>>, %arg4: memref<4x128xbf16, #tpu.memory_space<vmem>>, %arg5: memref<1x128xf32, #tpu.memory_space<vmem>>, %arg6: memref<128x128xbf16, #tpu.memory_space<vmem>>, %arg7: memref<1x128xf32, #tpu.memory_space<vmem>>, %arg8: memref<128x128xbf16, #tpu.memory_space<vmem>>, %arg9: memref<1x128xf32, #tpu.memory_space<vmem>>, %arg10: memref<1x128xf32, #tpu.memory_space<vmem>>, %arg11: memref<1x1xf32, #tpu.memory_space<vmem>>, %arg12: memref<8x1xf32, #tpu.memory_space<vmem>>) attributes {dimension_semantics = [#tpu.dimension_semantics<parallel>], iteration_bounds = array<i64: 1>, scalar_prefetch = 0 : i64, scratch_operands = 0 : i64, tpu.core_type = #tpu.core_type<tc>, window_params = [{transform_indices = @transform_0, window_bounds = array<i64: 8, 16>}, {transform_indices = @transform_1, window_bounds = array<i64: 8, 4>}, {pipeline_mode = #tpu.pipeline_mode<synchronous>, transform_indices = @transform_2, window_bounds = array<i64: 16, 128>}, {pipeline_mode = #tpu.pipeline_mode<synchronous>, transform_indices = @transform_3, window_bounds = array<i64: 4, 128>}, {pipeline_mode = #tpu.pipeline_mode<synchronous>, transform_indices = @transform_4, window_bounds = array<i64: 1, 128>}, {pipeline_mode = #tpu.pipeline_mode<synchronous>, transform_indices = @transform_5, window_bounds = array<i64: 128, 128>}, {pipeline_mode = #tpu.pipeline_mode<synchronous>, transform_indices = @transform_6, window_bounds = array<i64: 1, 128>}, {pipeline_mode = #tpu.pipeline_mode<synchronous>, transform_indices = @transform_7, window_bounds = array<i64: 128, 128>}, {pipeline_mode = #tpu.pipeline_mode<synchronous>, transform_indices = @transform_8, window_bounds = array<i64: 1, 128>}, {pipeline_mode = #tpu.pipeline_mode<synchronous>, transform_indices = @transform_9, window_bounds = array<i64: 1, 128>}, {pipeline_mode = #tpu.pipeline_mode<synchronous>, transform_indices = @transform_10, window_bounds = array<i64: 1, 1>}, {transform_indices = @transform_11, window_bounds = array<i64: 8, 1>}]} {
    %c0 = arith.constant 0 : index
    %c0_0 = arith.constant 0 : index
    %0 = vector.load %arg1[%c0, %c0_0] : memref<8x16xf32, #tpu.memory_space<vmem>>, vector<8x16xf32>
    %1 = arith.truncf %0 : vector<8x16xf32> to vector<8x16xbf16>
    %c0_1 = arith.constant 0 : index
    %c0_2 = arith.constant 0 : index
    %2 = vector.load %arg3[%c0_1, %c0_2] : memref<16x128xbf16, #tpu.memory_space<vmem>>, vector<16x128xbf16>
    %cst = arith.constant dense<0.000000e+00> : vector<8x128xf32>
    %3 = tpu.matmul %1, %2, %cst {dimension_numbers = #tpu.dot_dimension_numbers<[1], [0], [0], [1], [0, 0, 1, 1], [], []>} : vector<8x16xbf16>, vector<16x128xbf16>, vector<8x128xf32> -> vector<8x128xf32>
    %c0_3 = arith.constant 0 : index
    %c0_4 = arith.constant 0 : index
    %4 = vector.load %arg2[%c0_3, %c0_4] : memref<8x4xf32, #tpu.memory_space<vmem>>, vector<8x4xf32>
    %5 = arith.truncf %4 : vector<8x4xf32> to vector<8x4xbf16>
    %c0_5 = arith.constant 0 : index
    %c0_6 = arith.constant 0 : index
    %6 = vector.load %arg4[%c0_5, %c0_6] : memref<4x128xbf16, #tpu.memory_space<vmem>>, vector<4x128xbf16>
    %cst_7 = arith.constant dense<0.000000e+00> : vector<8x128xf32>
    %7 = tpu.matmul %5, %6, %cst_7 {dimension_numbers = #tpu.dot_dimension_numbers<[1], [0], [0], [1], [0, 0, 1, 1], [], []>} : vector<8x4xbf16>, vector<4x128xbf16>, vector<8x128xf32> -> vector<8x128xf32>
    %8 = arith.addf %3, %7 : vector<8x128xf32>
    %c0_8 = arith.constant 0 : index
    %c0_9 = arith.constant 0 : index
    %9 = vector.load %arg5[%c0_8, %c0_9] : memref<1x128xf32, #tpu.memory_space<vmem>>, vector<1x128xf32>
    %10 = vector.broadcast %9 : vector<1x128xf32> to vector<8x128xf32>
    %11 = arith.addf %8, %10 : vector<8x128xf32>
    %cst_10 = arith.constant 0.000000e+00 : f32
    %12 = vector.broadcast %cst_10 : f32 to vector<8x128xf32>
    %13 = arith.maximumf %11, %12 : vector<8x128xf32>
    %14 = arith.truncf %13 : vector<8x128xf32> to vector<8x128xbf16>
    %c0_11 = arith.constant 0 : index
    %c0_12 = arith.constant 0 : index
    %15 = vector.load %arg6[%c0_11, %c0_12] : memref<128x128xbf16, #tpu.memory_space<vmem>>, vector<128x128xbf16>
    %cst_13 = arith.constant dense<0.000000e+00> : vector<8x128xf32>
    %16 = tpu.matmul %14, %15, %cst_13 {dimension_numbers = #tpu.dot_dimension_numbers<[1], [0], [0], [1], [0, 0, 1, 1], [], []>} : vector<8x128xbf16>, vector<128x128xbf16>, vector<8x128xf32> -> vector<8x128xf32>
    %c0_14 = arith.constant 0 : index
    %c0_15 = arith.constant 0 : index
    %17 = vector.load %arg7[%c0_14, %c0_15] : memref<1x128xf32, #tpu.memory_space<vmem>>, vector<1x128xf32>
    %18 = vector.broadcast %17 : vector<1x128xf32> to vector<8x128xf32>
    %19 = arith.addf %16, %18 : vector<8x128xf32>
    %cst_16 = arith.constant 0.000000e+00 : f32
    %20 = vector.broadcast %cst_16 : f32 to vector<8x128xf32>
    %21 = arith.maximumf %19, %20 : vector<8x128xf32>
    %22 = arith.truncf %21 : vector<8x128xf32> to vector<8x128xbf16>
    %c0_17 = arith.constant 0 : index
    %c0_18 = arith.constant 0 : index
    %23 = vector.load %arg8[%c0_17, %c0_18] : memref<128x128xbf16, #tpu.memory_space<vmem>>, vector<128x128xbf16>
    %cst_19 = arith.constant dense<0.000000e+00> : vector<8x128xf32>
    %24 = tpu.matmul %22, %23, %cst_19 {dimension_numbers = #tpu.dot_dimension_numbers<[1], [0], [0], [1], [0, 0, 1, 1], [], []>} : vector<8x128xbf16>, vector<128x128xbf16>, vector<8x128xf32> -> vector<8x128xf32>
    %c0_20 = arith.constant 0 : index
    %c0_21 = arith.constant 0 : index
    %25 = vector.load %arg9[%c0_20, %c0_21] : memref<1x128xf32, #tpu.memory_space<vmem>>, vector<1x128xf32>
    %26 = vector.broadcast %25 : vector<1x128xf32> to vector<8x128xf32>
    %27 = arith.addf %24, %26 : vector<8x128xf32>
    %cst_22 = arith.constant 0.000000e+00 : f32
    %28 = vector.broadcast %cst_22 : f32 to vector<8x128xf32>
    %29 = arith.maximumf %27, %28 : vector<8x128xf32>
    %c0_23 = arith.constant 0 : index
    %c0_24 = arith.constant 0 : index
    %30 = vector.load %arg10[%c0_23, %c0_24] : memref<1x128xf32, #tpu.memory_space<vmem>>, vector<1x128xf32>
    %31 = vector.broadcast %30 : vector<1x128xf32> to vector<8x128xf32>
    %32 = arith.mulf %29, %31 : vector<8x128xf32>
    %cst_25 = arith.constant dense<0.000000e+00> : vector<8xf32>
    %33 = vector.multi_reduction <add>, %32, %cst_25 [1] : vector<8x128xf32> to vector<8xf32>
    %34 = vector.shape_cast %33 : vector<8xf32> to vector<8x1xf32>
    %c0_26 = arith.constant 0 : index
    %c0_27 = arith.constant 0 : index
    %35 = vector.load %arg11[%c0_26, %c0_27] : memref<1x1xf32, #tpu.memory_space<vmem>>, vector<1x1xf32>
    %36 = vector.broadcast %35 : vector<1x1xf32> to vector<8x1xf32>
    %37 = arith.addf %34, %36 : vector<8x1xf32>
    %38 = arith.negf %37 : vector<8x1xf32>
    %39 = math.exp %38 : vector<8x1xf32>
    %cst_28 = arith.constant 1.000000e+00 : f32
    %40 = vector.broadcast %cst_28 : f32 to vector<8x1xf32>
    %41 = arith.addf %40, %39 : vector<8x1xf32>
    %42 = arith.divf %40, %41 : vector<8x1xf32>
    %c0_29 = arith.constant 0 : index
    %c0_30 = arith.constant 0 : index
    %43 = vector.load %arg12[%c0_29, %c0_30] : memref<8x1xf32, #tpu.memory_space<vmem>>, vector<8x1xf32>
    tpu.vector_store %arg12[%c0_29, %c0_30], %42 {strides = array<i32>} : memref<8x1xf32, #tpu.memory_space<vmem>>, vector<8x1xf32>,
    return
  }
  func.func @transform_0(%arg0: i32) -> (i32, i32) {
    %c0_i32 = arith.constant 0 : i32
    %c0_i32_0 = arith.constant 0 : i32
    return %arg0, %c0_i32 : i32, i32
  }
  func.func @transform_1(%arg0: i32) -> (i32, i32) {
    %c0_i32 = arith.constant 0 : i32
    %c0_i32_0 = arith.constant 0 : i32
    return %arg0, %c0_i32 : i32, i32
  }
  func.func @transform_2(%arg0: i32) -> (i32, i32) {
    %c0_i32 = arith.constant 0 : i32
    %c0_i32_0 = arith.constant 0 : i32
    %c0_i32_1 = arith.constant 0 : i32
    return %c0_i32, %c0_i32_0 : i32, i32
  }
  func.func @transform_3(%arg0: i32) -> (i32, i32) {
    %c0_i32 = arith.constant 0 : i32
    %c0_i32_0 = arith.constant 0 : i32
    %c0_i32_1 = arith.constant 0 : i32
    return %c0_i32, %c0_i32_0 : i32, i32
  }
  func.func @transform_4(%arg0: i32) -> (i32, i32) {
    %c0_i32 = arith.constant 0 : i32
    %c0_i32_0 = arith.constant 0 : i32
    %c0_i32_1 = arith.constant 0 : i32
    return %c0_i32, %c0_i32_0 : i32, i32
  }
  func.func @transform_5(%arg0: i32) -> (i32, i32) {
    %c0_i32 = arith.constant 0 : i32
    %c0_i32_0 = arith.constant 0 : i32
    %c0_i32_1 = arith.constant 0 : i32
    return %c0_i32, %c0_i32_0 : i32, i32
  }
  func.func @transform_6(%arg0: i32) -> (i32, i32) {
    %c0_i32 = arith.constant 0 : i32
    %c0_i32_0 = arith.constant 0 : i32
    %c0_i32_1 = arith.constant 0 : i32
    return %c0_i32, %c0_i32_0 : i32, i32
  }
  func.func @transform_7(%arg0: i32) -> (i32, i32) {
    %c0_i32 = arith.constant 0 : i32
    %c0_i32_0 = arith.constant 0 : i32
    %c0_i32_1 = arith.constant 0 : i32
    return %c0_i32, %c0_i32_0 : i32, i32
  }
  func.func @transform_8(%arg0: i32) -> (i32, i32) {
    %c0_i32 = arith.constant 0 : i32
    %c0_i32_0 = arith.constant 0 : i32
    %c0_i32_1 = arith.constant 0 : i32
    return %c0_i32, %c0_i32_0 : i32, i32
  }
  func.func @transform_9(%arg0: i32) -> (i32, i32) {
    %c0_i32 = arith.constant 0 : i32
    %c0_i32_0 = arith.constant 0 : i32
    %c0_i32_1 = arith.constant 0 : i32
    return %c0_i32, %c0_i32_0 : i32, i32
  }
  func.func @transform_10(%arg0: i32) -> (i32, i32) {
    %c0_i32 = arith.constant 0 : i32
    %c0_i32_0 = arith.constant 0 : i32
    %c0_i32_1 = arith.constant 0 : i32
    return %c0_i32, %c0_i32_0 : i32, i32
  }
  func.func @transform_11(%arg0: i32) -> (i32, i32) {
    %c0_i32 = arith.constant 0 : i32
    %c0_i32_0 = arith.constant 0 : i32
    return %arg0, %c0_i32 : i32, i32
  }
}

</mosaic_0001>

<llo_original>
// kernel: tpu_custom_call.1
$region0: #{tpu_custom_call.1}
  #allocation0 [shape = 'u32[]', space=smem, size = 0x4, offset = 0x4, fixed_abs, tag = 'smem constant byte address 0x4 - core index']
  #allocation1 [shape = 'u32[144,128]{1,0:T(1,128)}', space=vmem, size = 0x12000, scoped, tag = 'internal scratch']
  #allocation2 [shape = 'f32[1,1]{1,0:T(1,128)S(1)}', space=vmem, size = 0x200, scoped, tag = 'scoped memory for tpu_custom_call.1']
  %s0 = inlined_call_operand.vmem [shape: f32[8,16], index: 0, kind: input, shape index: {}]
  %s1 = inlined_call_operand.vmem [shape: f32[8,4], index: 1, kind: input, shape index: {}]
  %s2 = inlined_call_operand.vmem [shape: bf16[16,128], index: 2, kind: input, shape index: {}]
  %s3 = inlined_call_operand.vmem [shape: bf16[4,128], index: 3, kind: input, shape index: {}]
  %s4 = inlined_call_operand.vmem [shape: f32[1,128], index: 4, kind: input, shape index: {}]
  %s5 = inlined_call_operand.hbm [shape: bf16[128,128], index: 5, kind: input, shape index: {}]
  %s6 = inlined_call_operand.vmem [shape: f32[1,128], index: 6, kind: input, shape index: {}]
  %s7 = inlined_call_operand.hbm [shape: bf16[128,128], index: 7, kind: input, shape index: {}]
  %s8 = inlined_call_operand.vmem [shape: f32[1,128], index: 8, kind: input, shape index: {}]
  %s9 = inlined_call_operand.vmem [shape: f32[1,128], index: 9, kind: input, shape index: {}]
  %s10 = inlined_call_operand.<no memory space> [shape: f32[1,1], index: 10, kind: input, shape index: {}]
  %s11 = inlined_call_operand.vmem [shape: f32[8,1], index: 11, kind: output, shape index: {}]
  %s12 = sld [smem:[#allocation0]]
  $region62: #{tpu_custom_call.1} parent=0
    _
  %s14 = ssub.s32 1, %s12
  %s15 = scalar_select 0, %s14, %s12
  %v16 = vstv %s10
  %17 = vst [vmem:[#allocation2] sm:$0x1] %v16
  $region1: #{tpu_custom_call.1} parent=0
    #allocation3 [shape = 'u8[32768]{0}', space=vmem, size = 0x8000, scoped, tag = 'input window, operand 5, single buffered']
    #allocation4 [shape = 's32[1]{0}', space=sflag, size = 0x4, scoped, tag = 'scoped memory for tpu_custom_call.1']
    #allocation5 [shape = 'u8[32768]{0}', space=vmem, size = 0x8000, scoped, tag = 'input window, operand 7, single buffered']
    #allocation6 [shape = 's32[1]{0}', space=sflag, size = 0x4, scoped, tag = 'scoped memory for tpu_custom_call.1']
    %18 = vsyncpa [#allocation4], 0
    %19 = vsyncpa [#allocation6], 0
    // Predicated region
    $region2: #{tpu_custom_call.1} parent=1 // pred_check
      _
    $region3: #{tpu_custom_call.1} parent=1 // pred_check_branch
      %21 = sbr.rel (0) target = $region5
    $region4: #{tpu_custom_call.1} parent=1 // pred_region
      _
    $region5: #{tpu_custom_call.1} parent=1 // pred_fallthru
      _
    // Predicated region
    $region6: #{tpu_custom_call.1} parent=1 // pred_check
      _
    $region7: #{tpu_custom_call.1} parent=1 // pred_check_branch
      %23 = sbr.rel (0) target = $region9
    $region8: #{tpu_custom_call.1} parent=1 // pred_region
      _
    $region9: #{tpu_custom_call.1} parent=1 // pred_fallthru
      _
    // Predicated region
    $region10: #{tpu_custom_call.1} parent=1 // pred_check
      _
    $region11: #{tpu_custom_call.1} parent=1 // pred_check_branch
      %25 = sbr.rel (0) target = $region13
    $region12: #{tpu_custom_call.1} parent=1 // pred_region
      _
    $region13: #{tpu_custom_call.1} parent=1 // pred_fallthru
      _
    // Predicated region
    $region14: #{tpu_custom_call.1} parent=1 // pred_check
      _
    $region15: #{tpu_custom_call.1} parent=1 // pred_check_branch
      %27 = sbr.rel (0) target = $region17
    $region16: #{tpu_custom_call.1} parent=1 // pred_region
      _
    $region17: #{tpu_custom_call.1} parent=1 // pred_fallthru
      _
    // Predicated region
    $region18: #{tpu_custom_call.1} parent=1 // pred_check
      _
    $region19: #{tpu_custom_call.1} parent=1 // pred_check_branch
      %29 = sbr.rel (0) target = $region21
    $region20: #{tpu_custom_call.1} parent=1 // pred_region
      _
    $region21: #{tpu_custom_call.1} parent=1 // pred_fallthru
      _
    // Predicated region
    $region22: #{tpu_custom_call.1} parent=1 // pred_check
      _
    $region23: #{tpu_custom_call.1} parent=1 // pred_check_branch
      %31 = sbr.rel (0) target = $region25
    $region24: #{tpu_custom_call.1} parent=1 // pred_region
      %s33 = ssub.s32 1024, 1024
      %34 = vsyncadd [#allocation4], %s33
      %s35 = sshll.u32 [#allocation3], 4
      %s36 = int_to_ptr.vmem [resolvable:$true] %s35
      %41 = dma.hbm_to_vmem [thread:$0]  %s5, 1024, %s36, [#allocation4], 64, 64, 4
    $region25: #{tpu_custom_call.1} parent=1 // pred_fallthru
      _
    // Predicated region
    $region26: #{tpu_custom_call.1} parent=1 // pred_check
      _
    $region27: #{tpu_custom_call.1} parent=1 // pred_check_branch
      %43 = sbr.rel (0) target = $region29
    $region28: #{tpu_custom_call.1} parent=1 // pred_region
      _
    $region29: #{tpu_custom_call.1} parent=1 // pred_fallthru
      _
    // Predicated region
    $region30: #{tpu_custom_call.1} parent=1 // pred_check
      _
    $region31: #{tpu_custom_call.1} parent=1 // pred_check_branch
      %45 = sbr.rel (0) target = $region33
    $region32: #{tpu_custom_call.1} parent=1 // pred_region
      %s47 = ssub.s32 1024, 1024
      %48 = vsyncadd [#allocation6], %s47
      %s49 = sshll.u32 [#allocation5], 4
      %s50 = int_to_ptr.vmem [resolvable:$true] %s49
      %55 = dma.hbm_to_vmem [thread:$0]  %s7, 1024, %s50, [#allocation6], 64, 64, 4
    $region33: #{tpu_custom_call.1} parent=1 // pred_fallthru
      _
    // Predicated region
    $region34: #{tpu_custom_call.1} parent=1 // pred_check
      _
    $region35: #{tpu_custom_call.1} parent=1 // pred_check_branch
      %57 = sbr.rel (0) target = $region37
    $region36: #{tpu_custom_call.1} parent=1 // pred_region
      _
    $region37: #{tpu_custom_call.1} parent=1 // pred_fallthru
      _
    // Predicated region
    $region38: #{tpu_custom_call.1} parent=1 // pred_check
      _
    $region39: #{tpu_custom_call.1} parent=1 // pred_check_branch
      %59 = sbr.rel (0) target = $region41
    $region40: #{tpu_custom_call.1} parent=1 // pred_region
      _
    $region41: #{tpu_custom_call.1} parent=1 // pred_fallthru
      _
    // Predicated region
    $region42: #{tpu_custom_call.1} parent=1 // pred_check
      _
    $region43: #{tpu_custom_call.1} parent=1 // pred_check_branch
      %61 = sbr.rel (0) target = $region45
    $region44: #{tpu_custom_call.1} parent=1 // pred_region
      _
    $region45: #{tpu_custom_call.1} parent=1 // pred_fallthru
      _
    // Predicated region
    $region46: #{tpu_custom_call.1} parent=1 // pred_check
      _
    $region47: #{tpu_custom_call.1} parent=1 // pred_check_branch
      %63 = sbr.rel (0) target = $region49
    $region48: #{tpu_custom_call.1} parent=1 // pred_region
      %64 = dma.done [#allocation4], 1024
    $region49: #{tpu_custom_call.1} parent=1 // pred_fallthru
      _
    // Predicated region
    $region50: #{tpu_custom_call.1} parent=1 // pred_check
      _
    $region51: #{tpu_custom_call.1} parent=1 // pred_check_branch
      %66 = sbr.rel (0) target = $region53
    $region52: #{tpu_custom_call.1} parent=1 // pred_region
      %67 = dma.done [#allocation6], 1024
    $region53: #{tpu_custom_call.1} parent=1 // pred_fallthru
      _
    %v69 = vld [vmem:[%s0] sm:$0xff]
    %v70 = vpack.c.bf16 %v69, %v69
    %v71 = vld [vmem:[%s2] sm:$0xf]
    %v72 = vld [vmem:[%s2 + $0x4] sm:$0xf]
    %v73 = vld [vmem:[%s1] sm:$0xff]
    %v74 = vpack.c.bf16 %v73, %v73
    %v75 = vld [vmem:[%s3] sm:$0x3]
    %vm76 = vcmask 31744
    %v78 = vsel %vm76, %v74, 0
    %vm80 = vcmask 1041408
    %v82 = vsel %vm80, %v75, 0
    %84 = vmatprep.subr.bf16.mxu0 0
    %85 = vmatpush1.bf16.msra.mxu0 %v82
    %86 = vmatprep.subr.bf16.mxu0 0
    %87 = vmatpush1.bf16.msra.mxu0 0
    %88 = vmatprep.subr.bf16.mxu0 0
    %89 = vmatpush1.bf16.msra.mxu0 0
    %90 = vmatprep.subr.bf16.mxu0 0
    %91 = vmatpush1.bf16.msra.mxu0 0
    %92 = vmatprep.subr.bf16.mxu0 0
    %93 = vmatpush1.bf16.msra.mxu0 0
    %94 = vmatprep.subr.bf16.mxu0 0
    %95 = vmatpush1.bf16.msra.mxu0 0
    %96 = vmatprep.subr.bf16.mxu0 0
    %97 = vmatpush1.bf16.msra.mxu0 0
    %98 = vmatprep.subr.bf16.mxu0 0
    %99 = vmatpush1.bf16.msra.mxu0 0
    %100 = vmatprep.subr.bf16.mxu0 0
    %101 = vmatpush1.bf16.msra.mxu0 0
    %102 = vmatprep.subr.bf16.mxu0 0
    %103 = vmatpush1.bf16.msra.mxu0 0
    %104 = vmatprep.subr.bf16.mxu0 0
    %105 = vmatpush1.bf16.msra.mxu0 0
    %106 = vmatprep.subr.bf16.mxu0 0
    %107 = vmatpush1.bf16.msra.mxu0 0
    %108 = vmatprep.subr.bf16.mxu0 0
    %109 = vmatpush1.bf16.msra.mxu0 0
    %110 = vmatprep.subr.bf16.mxu0 0
    %111 = vmatpush1.bf16.msra.mxu0 0
    %112 = vmatprep.subr.bf16.mxu0 0
    %113 = vmatpush1.bf16.msra.mxu0 0
    %114 = vmatprep.subr.bf16.mxu0 0
    %115 = vmatpush1.bf16.msra.mxu0 0
    %116 = vmatprep.mubr.bf16.mxu0 0
    %117 = vmatmul.mubr.bf16.gmra.mrb[0].mxu0 %v78
    %v118 = vpop.f32.mrb[0].mxu0
    %v119 = vadd.f32 0.0, %v118
    %v120 = vpop.f32.mrb[0].mxu0
    %v121 = vpop.f32.mrb[0].mxu0
    %v122 = vpop.f32.mrb[0].mxu0
    %123 = vdwg.mxu0
    %v126 = vunpack.c.l.b16 %v71
    %v127 = vunpack.c.l.b16 %v72
    %v128 = vpack.c.b16 %v127, %v126
    %vm130 = vcmask 130048
    %v132 = vsel %vm130, %v70, 0
    %134 = vmatprep.subr.bf16.mxu0 0
    %135 = vmatpush1.bf16.msra.mxu0 %v128
    %136 = vmatprep.subr.bf16.mxu0 0
    %137 = vmatpush1.bf16.msra.mxu0 0
    %138 = vmatprep.subr.bf16.mxu0 0
    %139 = vmatpush1.bf16.msra.mxu0 0
    %140 = vmatprep.subr.bf16.mxu0 0
    %141 = vmatpush1.bf16.msra.mxu0 0
    %142 = vmatprep.subr.bf16.mxu0 0
    %143 = vmatpush1.bf16.msra.mxu0 0
    %144 = vmatprep.subr.bf16.mxu0 0
    %145 = vmatpush1.bf16.msra.mxu0 0
    %146 = vmatprep.subr.bf16.mxu0 0
    %147 = vmatpush1.bf16.msra.mxu0 0
    %148 = vmatprep.subr.bf16.mxu0 0
    %149 = vmatpush1.bf16.msra.mxu0 0
    %150 = vmatprep.subr.bf16.mxu0 0
    %151 = vmatpush1.bf16.msra.mxu0 0
    %152 = vmatprep.subr.bf16.mxu0 0
    %153 = vmatpush1.bf16.msra.mxu0 0
    %154 = vmatprep.subr.bf16.mxu0 0
    %155 = vmatpush1.bf16.msra.mxu0 0
    %156 = vmatprep.subr.bf16.mxu0 0
    %157 = vmatpush1.bf16.msra.mxu0 0
    %158 = vmatprep.subr.bf16.mxu0 0
    %159 = vmatpush1.bf16.msra.mxu0 0
    %160 = vmatprep.subr.bf16.mxu0 0
    %161 = vmatpush1.bf16.msra.mxu0 0
    %162 = vmatprep.subr.bf16.mxu0 0
    %163 = vmatpush1.bf16.msra.mxu0 0
    %164 = vmatprep.subr.bf16.mxu0 0
    %165 = vmatpush1.bf16.msra.mxu0 0
    %166 = vmatprep.mubr.bf16.mxu0 0
    %167 = vmatmul.mubr.bf16.gmra.mrb[0].mxu0 %v132
    %v168 = vpop.f32.mrb[0].mxu0
    %v169 = vadd.f32 %v119, %v168
    %v170 = vpop.f32.mrb[0].mxu0
    %v171 = vpop.f32.mrb[0].mxu0
    %v172 = vpop.f32.mrb[0].mxu0
    %173 = vdwg.mxu0
    %v174 = vld [vmem:[%s4] sm:$0x1]
    %v176 = vlaneseq
    %v177 = vshrl.u32 %v176, 7
    %v178 = vsub.s32 0, %v177
    %v179 = vrot.slane %v174, %v178
    %v181 = vadd.f32 %v169, %v179
    %v182 = vmax.f32 %v181, 0.0
    %v183 = vpack.c.bf16 %v182, %v182
    %v184 = vld [vmem:[#allocation3] sm:$0xf]
    %v185 = vld [vmem:[#allocation3 + $0x4] sm:$0xf]
    %v186 = vld [vmem:[#allocation3 + $0x8] sm:$0xf]
    %v187 = vld [vmem:[#allocation3 + $0xc] sm:$0xf]
    %v188 = vld [vmem:[#allocation3 + $0x10] sm:$0xf]
    %v189 = vld [vmem:[#allocation3 + $0x14] sm:$0xf]
    %v190 = vld [vmem:[#allocation3 + $0x18] sm:$0xf]
    %v191 = vld [vmem:[#allocation3 + $0x1c] sm:$0xf]
    %v192 = vld [vmem:[#allocation3 + $0x20] sm:$0xf]
    %v193 = vld [vmem:[#allocation3 + $0x24] sm:$0xf]
    %v194 = vld [vmem:[#allocation3 + $0x28] sm:$0xf]
    %v195 = vld [vmem:[#allocation3 + $0x2c] sm:$0xf]
    %v196 = vld [vmem:[#allocation3 + $0x30] sm:$0xf]
    %v197 = vld [vmem:[#allocation3 + $0x34] sm:$0xf]
    %v198 = vld [vmem:[#allocation3 + $0x38] sm:$0xf]
    %v199 = vld [vmem:[#allocation3 + $0x3c] sm:$0xf]
    %v200 = vld [vmem:[%s6] sm:$0x1]
    %v202 = vlaneseq
    %v203 = vshrl.u32 %v202, 7
    %v204 = vsub.s32 0, %v203
    %v205 = vrot.slane %v200, %v204
    %v223 = vunpack.c.l.b16 %v184
    %v224 = vunpack.c.l.b16 %v185
    %v225 = vunpack.c.l.b16 %v186
    %v226 = vunpack.c.l.b16 %v187
    %v227 = vunpack.c.l.b16 %v188
    %v228 = vunpack.c.l.b16 %v189
    %v229 = vunpack.c.l.b16 %v190
    %v230 = vunpack.c.l.b16 %v191
    %v231 = vunpack.c.l.b16 %v192
    %v232 = vunpack.c.l.b16 %v193
    %v233 = vunpack.c.l.b16 %v194
    %v234 = vunpack.c.l.b16 %v195
    %v235 = vunpack.c.l.b16 %v196
    %v236 = vunpack.c.l.b16 %v197
    %v237 = vunpack.c.l.b16 %v198
    %v238 = vunpack.c.l.b16 %v199
    %v239 = vpack.c.b16 %v224, %v223
    %v240 = vpack.c.b16 %v226, %v225
    %v241 = vpack.c.b16 %v228, %v227
    %v242 = vpack.c.b16 %v230, %v229
    %v243 = vpack.c.b16 %v232, %v231
    %v244 = vpack.c.b16 %v234, %v233
    %v245 = vpack.c.b16 %v236, %v235
    %v246 = vpack.c.b16 %v238, %v237
    %255 = vmatprep.subr.bf16.mxu0 0
    %256 = vmatpush1.bf16.msra.mxu0 %v239
    %257 = vmatprep.subr.bf16.mxu0 0
    %258 = vmatpush1.bf16.msra.mxu0 %v240
    %259 = vmatprep.subr.bf16.mxu0 0
    %260 = vmatpush1.bf16.msra.mxu0 %v241
    %261 = vmatprep.subr.bf16.mxu0 0
    %262 = vmatpush1.bf16.msra.mxu0 %v242
    %263 = vmatprep.subr.bf16.mxu0 0
    %264 = vmatpush1.bf16.msra.mxu0 %v243
    %265 = vmatprep.subr.bf16.mxu0 0
    %266 = vmatpush1.bf16.msra.mxu0 %v244
    %267 = vmatprep.subr.bf16.mxu0 0
    %268 = vmatpush1.bf16.msra.mxu0 %v245
    %269 = vmatprep.subr.bf16.mxu0 0
    %270 = vmatpush1.bf16.msra.mxu0 %v246
    %271 = vmatprep.subr.bf16.mxu0 0
    %272 = vmatpush1.bf16.msra.mxu0 0
    %273 = vmatprep.subr.bf16.mxu0 0
    %274 = vmatpush1.bf16.msra.mxu0 0
    %275 = vmatprep.subr.bf16.mxu0 0
    %276 = vmatpush1.bf16.msra.mxu0 0
    %277 = vmatprep.subr.bf16.mxu0 0
    %278 = vmatpush1.bf16.msra.mxu0 0
    %279 = vmatprep.subr.bf16.mxu0 0
    %280 = vmatpush1.bf16.msra.mxu0 0
    %281 = vmatprep.subr.bf16.mxu0 0
    %282 = vmatpush1.bf16.msra.mxu0 0
    %283 = vmatprep.subr.bf16.mxu0 0
    %284 = vmatpush1.bf16.msra.mxu0 0
    %285 = vmatprep.subr.bf16.mxu0 0
    %286 = vmatpush1.bf16.msra.mxu0 0
    %287 = vmatprep.mubr.bf16.mxu0 0
    %288 = vmatmul.mubr.bf16.gmra.mrb[0].mxu0 %v183
    %v289 = vpop.f32.mrb[0].mxu0
    %v290 = vadd.f32 %v205, %v289
    %v291 = vpop.f32.mrb[0].mxu0
    %v292 = vpop.f32.mrb[0].mxu0
    %v293 = vpop.f32.mrb[0].mxu0
    %294 = vdwg.mxu0
    %v295 = vmax.f32 %v290, 0.0
    %v296 = vpack.c.bf16 %v295, %v295
    %v297 = vld [vmem:[#allocation5] sm:$0xf]
    %v298 = vld [vmem:[#allocation5 + $0x4] sm:$0xf]
    %v299 = vld [vmem:[#allocation5 + $0x8] sm:$0xf]
    %v300 = vld [vmem:[#allocation5 + $0xc] sm:$0xf]
    %v301 = vld [vmem:[#allocation5 + $0x10] sm:$0xf]
    %v302 = vld [vmem:[#allocation5 + $0x14] sm:$0xf]
    %v303 = vld [vmem:[#allocation5 + $0x18] sm:$0xf]
    %v304 = vld [vmem:[#allocation5 + $0x1c] sm:$0xf]
    %v305 = vld [vmem:[#allocation5 + $0x20] sm:$0xf]
    %v306 = vld [vmem:[#allocation5 + $0x24] sm:$0xf]
    %v307 = vld [vmem:[#allocation5 + $0x28] sm:$0xf]
    %v308 = vld [vmem:[#allocation5 + $0x2c] sm:$0xf]
    %v309 = vld [vmem:[#allocation5 + $0x30] sm:$0xf]
    %v310 = vld [vmem:[#allocation5 + $0x34] sm:$0xf]
    %v311 = vld [vmem:[#allocation5 + $0x38] sm:$0xf]
    %v312 = vld [vmem:[#allocation5 + $0x3c] sm:$0xf]
    %v313 = vld [vmem:[%s8] sm:$0x1]
    %v315 = vlaneseq
    %v316 = vshrl.u32 %v315, 7
    %v317 = vsub.s32 0, %v316
    %v318 = vrot.slane %v313, %v317
    %v336 = vunpack.c.l.b16 %v297
    %v337 = vunpack.c.l.b16 %v298
    %v338 = vunpack.c.l.b16 %v299
    %v339 = vunpack.c.l.b16 %v300
    %v340 = vunpack.c.l.b16 %v301
    %v341 = vunpack.c.l.b16 %v302
    %v342 = vunpack.c.l.b16 %v303
    %v343 = vunpack.c.l.b16 %v304
    %v344 = vunpack.c.l.b16 %v305
    %v345 = vunpack.c.l.b16 %v306
    %v346 = vunpack.c.l.b16 %v307
    %v347 = vunpack.c.l.b16 %v308
    %v348 = vunpack.c.l.b16 %v309
    %v349 = vunpack.c.l.b16 %v310
    %v350 = vunpack.c.l.b16 %v311
    %v351 = vunpack.c.l.b16 %v312
    %v352 = vpack.c.b16 %v337, %v336
    %v353 = vpack.c.b16 %v339, %v338
    %v354 = vpack.c.b16 %v341, %v340
    %v355 = vpack.c.b16 %v343, %v342
    %v356 = vpack.c.b16 %v345, %v344
    %v357 = vpack.c.b16 %v347, %v346
    %v358 = vpack.c.b16 %v349, %v348
    %v359 = vpack.c.b16 %v351, %v350
    %368 = vmatprep.subr.bf16.mxu0 0
    %369 = vmatpush1.bf16.msra.mxu0 %v352
    %370 = vmatprep.subr.bf16.mxu0 0
    %371 = vmatpush1.bf16.msra.mxu0 %v353
    %372 = vmatprep.subr.bf16.mxu0 0
    %373 = vmatpush1.bf16.msra.mxu0 %v354
    %374 = vmatprep.subr.bf16.mxu0 0
    %375 = vmatpush1.bf16.msra.mxu0 %v355
    %376 = vmatprep.subr.bf16.mxu0 0
    %377 = vmatpush1.bf16.msra.mxu0 %v356
    %378 = vmatprep.subr.bf16.mxu0 0
    %379 = vmatpush1.bf16.msra.mxu0 %v357
    %380 = vmatprep.subr.bf16.mxu0 0
    %381 = vmatpush1.bf16.msra.mxu0 %v358
    %382 = vmatprep.subr.bf16.mxu0 0
    %383 = vmatpush1.bf16.msra.mxu0 %v359
    %384 = vmatprep.subr.bf16.mxu0 0
    %385 = vmatpush1.bf16.msra.mxu0 0
    %386 = vmatprep.subr.bf16.mxu0 0
    %387 = vmatpush1.bf16.msra.mxu0 0
    %388 = vmatprep.subr.bf16.mxu0 0
    %389 = vmatpush1.bf16.msra.mxu0 0
    %390 = vmatprep.subr.bf16.mxu0 0
    %391 = vmatpush1.bf16.msra.mxu0 0
    %392 = vmatprep.subr.bf16.mxu0 0
    %393 = vmatpush1.bf16.msra.mxu0 0
    %394 = vmatprep.subr.bf16.mxu0 0
    %395 = vmatpush1.bf16.msra.mxu0 0
    %396 = vmatprep.subr.bf16.mxu0 0
    %397 = vmatpush1.bf16.msra.mxu0 0
    %398 = vmatprep.subr.bf16.mxu0 0
    %399 = vmatpush1.bf16.msra.mxu0 0
    %400 = vmatprep.mubr.bf16.mxu0 0
    %401 = vmatmul.mubr.bf16.gmra.mrb[0].mxu0 %v296
    %v402 = vpop.f32.mrb[0].mxu0
    %v403 = vadd.f32 %v318, %v402
    %v404 = vpop.f32.mrb[0].mxu0
    %v405 = vpop.f32.mrb[0].mxu0
    %v406 = vpop.f32.mrb[0].mxu0
    %407 = vdwg.mxu0
    %v408 = vmax.f32 %v403, 0.0
    %v409 = vld [vmem:[%s9] sm:$0x1]
    %v411 = vlaneseq
    %v412 = vshrl.u32 %v411, 7
    %v413 = vsub.s32 0, %v412
    %v414 = vrot.slane %v409, %v413
    %v416 = vmul.f32 %v408, %v414
    %417 = vadd.xlane.f32.xlu0 %v416
    %v418 = vpop.xlane.xlu0 %417
    %v419 = vld [vmem:[#allocation2] sm:$0x1]
    %v421 = vlaneseq
    %v422 = vshrl.u32 %v421, 7
    %v423 = vsub.s32 0, %v422
    %v424 = vrot.slane %v419, %v423
    %v426 = vadd.f32 %v418, %v424
    %v427 = vxor.u32 %v426, 2147483648
    %v428 = vmul.f32 %v427, 1.442695
    %v429 = vpow.pop %v428
    %v430 = vadd.f32 %v429, 1.0
    %v431 = vrcp.pop %v430
    %v432 = vmul.f32 1.0, %v431
    %vm433 = vcmask 7168
    %434 = vst.msk [vmem:[%s11] sm:$0xff] %vm433, %v432
    // Predicated region
    $region54: #{tpu_custom_call.1} parent=1 // pred_check
      _
    $region55: #{tpu_custom_call.1} parent=1 // pred_check_branch
      %436 = sbr.rel (0) target = $region57
    $region56: #{tpu_custom_call.1} parent=1 // pred_region
      _
    $region57: #{tpu_custom_call.1} parent=1 // pred_fallthru
      _
    // Predicated region
    $region58: #{tpu_custom_call.1} parent=1 // pred_check
      _
    $region59: #{tpu_custom_call.1} parent=1 // pred_check_branch
      %438 = sbr.rel (0) target = $region61
    $region60: #{tpu_custom_call.1} parent=1 // pred_region
      _
    $region61: #{tpu_custom_call.1} parent=1 // pred_fallthru
      _
    %439 = vsyncpa [#allocation4], 1
    %440 = vsyncpa [#allocation6], 1

</llo_original>
